<compile_context>
chip_gen: v7x
topology: tpu7x:2x2x1
jax: 0.10.0
libtpu: 0.0.40
codegen_flags: <defaults>
</compile_context>

<pallas_src>
import functools

import jax
import jax.numpy as jnp
from jax import lax
from jax.experimental import pallas as pl
from jax.experimental.pallas import tpu as pltpu

_LANES = 128
_SUBLANES = 8
_VMEM_LIMIT_BYTES = 48 * 1024 * 1024  # <= v7x 64 MiB physical; fine on v5e/v6e.


def _contrastive_loss_kernel(
    x0_ref, x1_ref, y_ref, out_ref, *, margin, n_rows, block_rows, mask_tail
):
    i = pl.program_id(0)

    # Hot path: upcast in VMEM, elementwise diff, MXU row-reduction, hinge.
    x0 = x0_ref[...].astype(jnp.float32)            # (TN, D)
    x1 = x1_ref[...].astype(jnp.float32)            # (TN, D)
    y = y_ref[...].astype(jnp.float32)              # (TN, 1)

    diff = x0 - x1
    sq = diff * diff
    # Row reduction on the otherwise-idle MXU: (TN, D) @ (D, 1) -> (TN, 1).
    ones = jnp.ones((sq.shape[1], 1), jnp.float32)
    dist_sq = jnp.dot(sq, ones, preferred_element_type=jnp.float32)  # (TN, 1)
    dist = jnp.sqrt(dist_sq)
    clamped = jnp.maximum(margin - dist, 0.0)
    loss = y * dist_sq + (1.0 - y) * (clamped * clamped)             # (TN, 1)

    def _store(v):
        # Scalar partial sum, broadcast to a lane-dense (8, 128) output tile.
        out_ref[...] = jnp.broadcast_to(jnp.sum(v, keepdims=True), out_ref.shape)

    if mask_tail:
        is_last = i == pl.num_programs(0) - 1

        @pl.when(is_last)
        def _():
            # Mask AFTER all nonlinearities: jnp.where selects 0.0, so NaN/Inf
            # produced from garbage tail rows cannot reach the accumulator.
            row_ids = lax.broadcasted_iota(jnp.int32, loss.shape, 0) + i * block_rows
            _store(jnp.where(row_ids < n_rows, loss, 0.0))

        @pl.when(jnp.logical_not(is_last))
        def _():
            _store(loss)
    else:
        _store(loss)


def contrastive_loss(x0, x1, y, margin=1.0, block_rows=None):
    """JAX/Pallas equivalent of ContrastiveLoss(margin).forward(x0, x1, y).

    x0, x1: (N, D) float arrays (any float dtype; upcast to f32 in-kernel)
    y:      (N,)  labels (0/1, any numeric dtype)
    returns a float32 scalar.
    """
    assert x0.ndim == 2 and x1.ndim == 2 and y.ndim == 1
    assert x0.shape == x1.shape
    assert x1.shape[0] == y.shape[0]
    assert x1.shape[0] > 0

    n, d = x0.shape
    y2d = y.reshape(n, 1).astype(jnp.float32)  # tiny; exact for 0/1 labels

    itemsize = jnp.dtype(x0.dtype).itemsize
    padded_d = ((d + _LANES - 1) // _LANES) * _LANES
    # Padded per-row VMEM bytes: x0 + x1 rows (lane-padded to 128) plus the
    # lane-padded (tn, 1) -> (tn, 128) float32 y row.
    row_bytes = 2 * padded_d * itemsize + _LANES * 4

    if block_rows is None:
        # BlockSpec double-buffers every operand: keep
        #   2 * (x0_tile + x1_tile + y_tile) <= ~80% of the scoped VMEM limit.
        per_buffer_budget = int(0.8 * _VMEM_LIMIT_BYTES) // 2
        tn = per_buffer_budget // row_bytes
    else:
        tn = int(block_rows)
    tn = max(_SUBLANES, (tn // _SUBLANES) * _SUBLANES)
    if tn >= n:
        tn = n          # full-extent block is always layout-legal
        grid_n = 1
    else:
        grid_n = pl.cdiv(n, tn)
    mask_tail = (n % tn) != 0

    kernel = functools.partial(
        _contrastive_loss_kernel,
        margin=float(margin),
        n_rows=int(n),
        block_rows=int(tn),
        mask_tail=bool(mask_tail),
    )

    partials = pl.pallas_call(
        kernel,
        out_shape=jax.ShapeDtypeStruct((grid_n * _SUBLANES, _LANES), jnp.float32),
        grid_spec=pltpu.PrefetchScalarGridSpec(
            num_scalar_prefetch=0,
            grid=(grid_n,),
            in_specs=[
                pl.BlockSpec((tn, d), lambda i: (i, 0)),   # x0 tile
                pl.BlockSpec((tn, d), lambda i: (i, 0)),   # x1 tile
                pl.BlockSpec((tn, 1), lambda i: (i, 0)),   # y tile
            ],
            # (8, 128) per-step output tile: unmasked lane-dense stores, and a
            # block shape that satisfies the (8, 128) tiling rule for any grid.
            out_specs=pl.BlockSpec((_SUBLANES, _LANES), lambda i: (i, 0)),
        ),
        compiler_params=pltpu.CompilerParams(
            dimension_semantics=("parallel",),     # partials are independent
            vmem_limit_bytes=_VMEM_LIMIT_BYTES,
        ),
    )(x0, x1, y2d)

    per_block = partials.reshape(grid_n, _SUBLANES, _LANES)[:, 0, 0]
    return jnp.sum(per_block) * (0.5 / n)


def _reference_loss(x0, x1, y, margin=1.0):
    x0 = x0.astype(jnp.float32)
    x1 = x1.astype(jnp.float32)
    y = y.astype(jnp.float32)
    diff = x0 - x1
    dist_sq = jnp.sum(diff ** 2, axis=1)
    dist = jnp.sqrt(dist_sq)
    mdist = margin - dist
    clamped = jnp.maximum(mdist, 0.0)
    loss = y * dist_sq + (1.0 - y) * clamped ** 2
    return jnp.sum(loss) / 2.0 / x0.shape[0]


if __name__ == "__main__":
    key = jax.random.PRNGKey(0)
    k0, k1, k2, k3, k4, k5 = jax.random.split(key, 6)

    # Small shapes consistent with the module's 2-D embedding inputs.
    N, D = 8, 32
    x0 = jax.random.normal(k0, (N, D), dtype=jnp.float32)
    x1 = jax.random.normal(k1, (N, D), dtype=jnp.float32)
    y = jax.random.bernoulli(k2, 0.5, (N,)).astype(jnp.float32)

    loss = jax.block_until_ready(contrastive_loss(x0, x1, y, margin=1.0))
    ref = _reference_loss(x0, x1, y, margin=1.0)
    assert jnp.allclose(loss, ref, rtol=1e-4, atol=1e-5), (loss, ref)

    # Multi-step grid with parallel per-block partial sums and a ragged tail
    # (N not a multiple of the row tile) to exercise the gated masking path.
    N2, D2 = 200, 32
    x0b = jax.random.normal(k3, (N2, D2), dtype=jnp.float32)
    x1b = jax.random.normal(k4, (N2, D2), dtype=jnp.float32)
    yb = jax.random.bernoulli(k5, 0.5, (N2,)).astype(jnp.float32)

    loss2 = jax.block_until_ready(
        contrastive_loss(x0b, x1b, yb, margin=1.0, block_rows=64)
    )
    ref2 = _reference_loss(x0b, x1b, yb, margin=1.0)
    assert jnp.allclose(loss2, ref2, rtol=1e-4, atol=1e-5), (loss2, ref2)

    print("KERNEL_OK")
</pallas_src>

<mosaic_0001>
module attributes {stable_mosaic.version = 11 : i64} {
  func.func @_contrastive_loss_kernel(%arg0: i32, %arg1: memref<8x32xf32, #tpu.memory_space<vmem>>, %arg2: memref<8x32xf32, #tpu.memory_space<vmem>>, %arg3: memref<8x1xf32, #tpu.memory_space<vmem>>, %arg4: memref<8x128xf32, #tpu.memory_space<vmem>>) attributes {dimension_semantics = [#tpu.dimension_semantics<parallel>], iteration_bounds = array<i64: 1>, scalar_prefetch = 0 : i64, scratch_operands = 0 : i64, tpu.core_type = #tpu.core_type<tc>, window_params = [{transform_indices = @transform_0, window_bounds = array<i64: 8, 32>}, {transform_indices = @transform_1, window_bounds = array<i64: 8, 32>}, {transform_indices = @transform_2, window_bounds = array<i64: 8, 1>}, {transform_indices = @transform_3, window_bounds = array<i64: 8, 128>}]} {
    %c0 = arith.constant 0 : index
    %c0_0 = arith.constant 0 : index
    %0 = vector.load %arg1[%c0, %c0_0] : memref<8x32xf32, #tpu.memory_space<vmem>>, vector<8x32xf32>
    %c0_1 = arith.constant 0 : index
    %c0_2 = arith.constant 0 : index
    %1 = vector.load %arg2[%c0_1, %c0_2] : memref<8x32xf32, #tpu.memory_space<vmem>>, vector<8x32xf32>
    %c0_3 = arith.constant 0 : index
    %c0_4 = arith.constant 0 : index
    %2 = vector.load %arg3[%c0_3, %c0_4] : memref<8x1xf32, #tpu.memory_space<vmem>>, vector<8x1xf32>
    %3 = arith.subf %0, %1 : vector<8x32xf32>
    %4 = arith.mulf %3, %3 : vector<8x32xf32>
    %cst = arith.constant 1.000000e+00 : f32
    %5 = vector.broadcast %cst : f32 to vector<32x1xf32>
    %cst_5 = arith.constant dense<0.000000e+00> : vector<8x1xf32>
    %6 = tpu.matmul %4, %5, %cst_5 {dimension_numbers = #tpu.dot_dimension_numbers<[1], [0], [0], [1], [0, 0, 1, 1], [], []>} : vector<8x32xf32>, vector<32x1xf32>, vector<8x1xf32> -> vector<8x1xf32>
    %7 = math.sqrt %6 : vector<8x1xf32>
    %cst_6 = arith.constant 1.000000e+00 : f32
    %8 = vector.broadcast %cst_6 : f32 to vector<8x1xf32>
    %9 = arith.subf %8, %7 : vector<8x1xf32>
    %cst_7 = arith.constant 0.000000e+00 : f32
    %10 = vector.broadcast %cst_7 : f32 to vector<8x1xf32>
    %11 = arith.maximumf %9, %10 : vector<8x1xf32>
    %12 = arith.mulf %2, %6 : vector<8x1xf32>
    %cst_8 = arith.constant 1.000000e+00 : f32
    %13 = vector.broadcast %cst_8 : f32 to vector<8x1xf32>
    %14 = arith.subf %13, %2 : vector<8x1xf32>
    %15 = arith.mulf %11, %11 : vector<8x1xf32>
    %16 = arith.mulf %14, %15 : vector<8x1xf32>
    %17 = arith.addf %12, %16 : vector<8x1xf32>
    %18 = vector.shape_cast %17 : vector<8x1xf32> to vector<1x8x1xf32>
    %cst_9 = arith.constant dense<0.000000e+00> : vector<1xf32>
    %19 = vector.multi_reduction <add>, %18, %cst_9 [1, 2] : vector<1x8x1xf32> to vector<1xf32>
    %20 = vector.shape_cast %19 : vector<1xf32> to vector<1x1x1xf32>
    %21 = vector.extract %20[0, 0, 0] : f32 from vector<1x1x1xf32>
    %22 = vector.broadcast %21 : f32 to vector<1x1xf32>
    %23 = vector.shape_cast %22 : vector<1x1xf32> to vector<1x1xf32>
    %24 = vector.broadcast %23 : vector<1x1xf32> to vector<8x128xf32>
    %c0_10 = arith.constant 0 : index
    %c0_11 = arith.constant 0 : index
    %25 = vector.load %arg4[%c0_10, %c0_11] : memref<8x128xf32, #tpu.memory_space<vmem>>, vector<8x128xf32>
    tpu.vector_store %arg4[%c0_10, %c0_11], %24 {strides = array<i32>} : memref<8x128xf32, #tpu.memory_space<vmem>>, vector<8x128xf32>,
    return
  }
  func.func @transform_0(%arg0: i32) -> (i32, i32) {
    %c0_i32 = arith.constant 0 : i32
    %c0_i32_0 = arith.constant 0 : i32
    return %arg0, %c0_i32 : i32, i32
  }
  func.func @transform_1(%arg0: i32) -> (i32, i32) {
    %c0_i32 = arith.constant 0 : i32
    %c0_i32_0 = arith.constant 0 : i32
    return %arg0, %c0_i32 : i32, i32
  }
  func.func @transform_2(%arg0: i32) -> (i32, i32) {
    %c0_i32 = arith.constant 0 : i32
    %c0_i32_0 = arith.constant 0 : i32
    return %arg0, %c0_i32 : i32, i32
  }
  func.func @transform_3(%arg0: i32) -> (i32, i32) {
    %c0_i32 = arith.constant 0 : i32
    %c0_i32_0 = arith.constant 0 : i32
    return %arg0, %c0_i32 : i32, i32
  }
}

</mosaic_0001>

<llo_original>
// kernel: tpu_custom_call.1
$region0: #{tpu_custom_call.1}
  #allocation0 [shape = 'u32[]', space=smem, size = 0x4, offset = 0x4, fixed_abs, tag = 'smem constant byte address 0x4 - core index']
  #allocation1 [shape = 'u32[144,128]{1,0:T(1,128)}', space=vmem, size = 0x12000, scoped, tag = 'internal scratch']
  %s0 = inlined_call_operand.vmem [shape: f32[8,32], index: 0, kind: input, shape index: {}]
  %s1 = inlined_call_operand.hbm [shape: f32[8,32], index: 1, kind: input, shape index: {}]
  %s2 = inlined_call_operand.vmem [shape: f32[8,1], index: 2, kind: input, shape index: {}]
  %s3 = inlined_call_operand.hbm [shape: f32[8,128], index: 3, kind: output, shape index: {}]
  %s4 = sld [smem:[#allocation0]]
  $region26: #{tpu_custom_call.1} parent=0
    _
  %s6 = ssub.s32 1, %s4
  %s7 = scalar_select 0, %s6, %s4
  $region1: #{tpu_custom_call.1} parent=0
    #allocation2 [shape = 'u8[4096]{0}', space=vmem, size = 0x1000, scoped, tag = 'input window, operand 1, single buffered']
    #allocation3 [shape = 's32[1]{0}', space=sflag, size = 0x4, scoped, tag = 'scoped memory for tpu_custom_call.1']
    #allocation4 [shape = 's32[1]{0}', space=sflag, size = 0x4, scoped, tag = 'scoped memory for tpu_custom_call.1']
    #allocation5 [shape = 'u8[4096]{0}', space=vmem, size = 0x1000, scoped, tag = 'output window, operand 0, single buffered']
    %8 = vsyncpa [#allocation3], 0
    %9 = vsyncpa [#allocation4], 0
    // Predicated region
    $region2: #{tpu_custom_call.1} parent=1 // pred_check
      _
    $region3: #{tpu_custom_call.1} parent=1 // pred_check_branch
      %11 = sbr.rel (0) target = $region5
    $region4: #{tpu_custom_call.1} parent=1 // pred_region
      _
    $region5: #{tpu_custom_call.1} parent=1 // pred_fallthru
      _
    // Predicated region
    $region6: #{tpu_custom_call.1} parent=1 // pred_check
      _
    $region7: #{tpu_custom_call.1} parent=1 // pred_check_branch
      %13 = sbr.rel (0) target = $region9
    $region8: #{tpu_custom_call.1} parent=1 // pred_region
      %s15 = ssub.s32 128, 128
      %16 = vsyncadd [#allocation3], %s15
      %s18 = sshll.u32 [#allocation2], 4
      %s19 = int_to_ptr.vmem [resolvable:$true] %s18
      %21 = dma.hbm_to_vmem [thread:$0]  %s1, 128, %s19, [#allocation3]
    $region9: #{tpu_custom_call.1} parent=1 // pred_fallthru
      _
    // Predicated region
    $region10: #{tpu_custom_call.1} parent=1 // pred_check
      _
    $region11: #{tpu_custom_call.1} parent=1 // pred_check_branch
      %23 = sbr.rel (0) target = $region13
    $region12: #{tpu_custom_call.1} parent=1 // pred_region
      _
    $region13: #{tpu_custom_call.1} parent=1 // pred_fallthru
      _
    // Predicated region
    $region14: #{tpu_custom_call.1} parent=1 // pred_check
      _
    $region15: #{tpu_custom_call.1} parent=1 // pred_check_branch
      %25 = sbr.rel (0) target = $region17
    $region16: #{tpu_custom_call.1} parent=1 // pred_region
      %26 = dma.done [#allocation3], 128
    $region17: #{tpu_custom_call.1} parent=1 // pred_fallthru
      _
    %v27 = vld [vmem:[%s0] sm:$0xff]
    %v28 = vld [vmem:[#allocation2] sm:$0xff]
    %v29 = vld [vmem:[%s2] sm:$0xff]
    %v30 = vsub.f32 %v27, %v28
    %v31 = vmul.f32 %v30, %v30
    %vm32 = vcmask 261120
    %v34 = vsel %vm32, %v31, 0
    %36 = vmatprep.subr.mxu0 0.0
    %37 = vmatpush1.msra.mxu0 1.0
    %38 = vmatprep.subr.mxu0 0.0
    %39 = vmatpush1.msra.mxu0 1.0
    %40 = vmatprep.subr.mxu0 0.0
    %41 = vmatpush1.msra.mxu0 1.0
    %42 = vmatprep.subr.mxu0 0.0
    %43 = vmatpush1.msra.mxu0 1.0
    %44 = vmatprep.subr.mxu0 0.0
    %45 = vmatpush1.msra.mxu0 0.0
    %46 = vmatprep.subr.mxu0 0.0
    %47 = vmatpush1.msra.mxu0 0.0
    %48 = vmatprep.subr.mxu0 0.0
    %49 = vmatpush1.msra.mxu0 0.0
    %50 = vmatprep.subr.mxu0 0.0
    %51 = vmatpush1.msra.mxu0 0.0
    %52 = vmatprep.subr.mxu0 0.0
    %53 = vmatpush1.msra.mxu0 0.0
    %54 = vmatprep.subr.mxu0 0.0
    %55 = vmatpush1.msra.mxu0 0.0
    %56 = vmatprep.subr.mxu0 0.0
    %57 = vmatpush1.msra.mxu0 0.0
    %58 = vmatprep.subr.mxu0 0.0
    %59 = vmatpush1.msra.mxu0 0.0
    %60 = vmatprep.subr.mxu0 0.0
    %61 = vmatpush1.msra.mxu0 0.0
    %62 = vmatprep.subr.mxu0 0.0
    %63 = vmatpush1.msra.mxu0 0.0
    %64 = vmatprep.subr.mxu0 0.0
    %65 = vmatpush1.msra.mxu0 0.0
    %66 = vmatprep.subr.mxu0 0.0
    %67 = vmatpush1.msra.mxu0 0.0
    %68 = vmatprep.subr.mxu0 0.0
    %69 = vmatpush1.msra.mxu0 0.0
    %70 = vmatprep.subr.mxu0 0.0
    %71 = vmatpush1.msra.mxu0 0.0
    %72 = vmatprep.subr.mxu0 0.0
    %73 = vmatpush1.msra.mxu0 0.0
    %74 = vmatprep.subr.mxu0 0.0
    %75 = vmatpush1.msra.mxu0 0.0
    %76 = vmatprep.subr.mxu0 0.0
    %77 = vmatpush1.msra.mxu0 0.0
    %78 = vmatprep.subr.mxu0 0.0
    %79 = vmatpush1.msra.mxu0 0.0
    %80 = vmatprep.subr.mxu0 0.0
    %81 = vmatpush1.msra.mxu0 0.0
    %82 = vmatprep.subr.mxu0 0.0
    %83 = vmatpush1.msra.mxu0 0.0
    %84 = vmatprep.subr.mxu0 0.0
    %85 = vmatpush1.msra.mxu0 0.0
    %86 = vmatprep.subr.mxu0 0.0
    %87 = vmatpush1.msra.mxu0 0.0
    %88 = vmatprep.subr.mxu0 0.0
    %89 = vmatpush1.msra.mxu0 0.0
    %90 = vmatprep.subr.mxu0 0.0
    %91 = vmatpush1.msra.mxu0 0.0
    %92 = vmatprep.subr.mxu0 0.0
    %93 = vmatpush1.msra.mxu0 0.0
    %94 = vmatprep.subr.mxu0 0.0
    %95 = vmatpush1.msra.mxu0 0.0
    %96 = vmatprep.subr.mxu0 0.0
    %97 = vmatpush1.msra.mxu0 0.0
    %98 = vmatprep.subr.mxu0 0.0
    %99 = vmatpush1.msra.mxu0 0.0
    %100 = vmatprep.mubr.f32.mxu0 0.0
    %101 = vmatmul.mubr.f32.gmra.mrb[0].mxu0 %v34
    %v102 = vpop.f32.mrb[0].mxu0
    %v103 = vadd.f32 0.0, %v102
    %v104 = vpop.f32.mrb[0].mxu0
    %105 = vdwg.mxu0
    %v106 = vrsqrt.pop %v103
    %v107 = vmul.f32 %v103, %v106
    %vm108 = vcmp.eq.f32.partialorder %v103, inf
    %v109 = vsel %vm108, %v103, %v107
    %vm110 = vcmp.eq.f32.partialorder %v103, 0.0
    %v111 = vand.u32 %v103, 2147483648
    %v112 = vsel %vm110, %v111, %v109
    %v113 = vsub.f32 1.0, %v112
    %v114 = vmax.f32 %v113, 0.0
    %v115 = vmul.f32 %v29, %v103
    %v116 = vsub.f32 1.0, %v29
    %v117 = vmul.f32 %v114, %v114
    %v118 = vmul.f32 %v116, %v117
    %v119 = vadd.f32 %v115, %v118
    %vm120 = vcmask 7168
    %v121 = vsel %vm120, %v119, 0.0
    %122 = vadd.xlane.f32.xlu0 %v121
    %v123 = vpop.xlane.xlu0 %122
    %v124 = vrot.slane %v123, 4
    %v125 = vadd.f32 %v123, %v124
    %v126 = vrot.slane %v125, 2
    %v127 = vadd.f32 %v125, %v126
    %v128 = vrot.slane %v127, 1
    %v129 = vadd.f32 %v127, %v128
    %s130 = vtos %v129
    %v131 = vstv %s130
    %132 = vst [vmem:[#allocation5] sm:$0xff] %v131
    // Predicated region
    $region18: #{tpu_custom_call.1} parent=1 // pred_check
      _
    $region19: #{tpu_custom_call.1} parent=1 // pred_check_branch
      %134 = sbr.rel (0) target = $region21
    $region20: #{tpu_custom_call.1} parent=1 // pred_region
      %s136 = ssub.s32 128, 128
      %137 = vsyncadd [#allocation4], %s136
      %s139 = sshll.u32 [#allocation5], 4
      %s140 = int_to_ptr.vmem [resolvable:$true] %s139
      %142 = dma.vmem_to_hbm [thread:$0]  %s140, 128, %s3, [#allocation4]
    $region21: #{tpu_custom_call.1} parent=1 // pred_fallthru
      _
    // Predicated region
    $region22: #{tpu_custom_call.1} parent=1 // pred_check
      _
    $region23: #{tpu_custom_call.1} parent=1 // pred_check_branch
      %144 = sbr.rel (0) target = $region25
    $region24: #{tpu_custom_call.1} parent=1 // pred_region
      %145 = dma.done [#allocation4], 128
    $region25: #{tpu_custom_call.1} parent=1 // pred_fallthru
      _
    %146 = vsyncpa [#allocation3], 1
    %147 = vsyncpa [#allocation4], 1

</llo_original>
